<compile_context>
chip_gen: v7x
topology: tpu7x:2x2x1
jax: 0.10.0
libtpu: 0.0.40
codegen_flags: <defaults>
</compile_context>

<pallas_src>
import numpy as np
import jax
import jax.numpy as jnp
from jax.experimental import pallas as pl
from jax.experimental.pallas import tpu as pltpu


def cam_project_kernel(a_ref, b_ref, pw_ref, out_ref):
    # a_ref : (9,)  SMEM  row-major A = K' @ R   (folded intrinsics+rotation)
    # b_ref : (3,)  SMEM  b = A @ t              (folded translation)
    # pw_ref: (3, TM, 128) VMEM  SoA world-point block (coordinate planes)
    # out_ref:(3, TM, 128) VMEM  pixel-point block
    x = pw_ref[0]
    y = pw_ref[1]
    z = pw_ref[2]

    # Single affine transform, explicit VPU FMAs (no degenerate 3x3 matmul).
    ux = a_ref[0] * x + a_ref[1] * y + a_ref[2] * z + b_ref[0]
    uy = a_ref[3] * x + a_ref[4] * y + a_ref[5] * z + b_ref[1]
    uz = a_ref[6] * x + a_ref[7] * y + a_ref[8] * z + b_ref[2]

    # One exact reciprocal per point instead of three divides.  Do NOT use
    # pl.reciprocal(approx=True): at pixel magnitudes (~hundreds) the ~2^-12
    # relative error of the approximate EUP recip would exceed tolerance.
    inv_z = 1.0 / uz
    out_ref[0] = ux * inv_z
    out_ref[1] = uy * inv_z
    # cam_z / cam_z == 1.0 exactly for every finite nonzero cam_z.
    out_ref[2] = jnp.ones_like(uz)


def _round_up(x, m):
    return (x + m - 1) // m * m


def cam_model_forward(pw, k, r, t, *, lanes=128, sublane_tile=512):
    """pw: (N, 1, 3) float32 world points.  Returns (N, 3) pixel points."""
    N = pw.shape[0]

    # Fold K', R, t into one affine transform on the host (float64 so the fold
    # itself adds no error beyond the final f32 rounding):
    #   pix_unnorm = K' @ R @ (p + t) = A @ p + b,  A = K'@R,  b = A@t.
    k64 = np.asarray(k, np.float64)
    r64 = np.asarray(r, np.float64)
    t64 = np.asarray(t, np.float64).reshape(3)
    kp = np.array([[k64[0, 0], 0.0, k64[0, 2]],
                   [0.0, k64[1, 1], k64[1, 2]],
                   [0.0, 0.0, 1.0]], np.float64)
    a64 = kp @ r64
    b64 = a64 @ t64
    a_flat = jnp.asarray(a64.reshape(9), jnp.float32)
    b_flat = jnp.asarray(b64, jnp.float32)

    # SoA layout: each coordinate becomes an (M, 128) plane so every vreg is a
    # full (8, 128) tile and every store is a full-width, unmasked vst.
    rows = pl.cdiv(N, lanes)
    tm = min(sublane_tile, _round_up(rows, 8))   # sublane tile, multiple of 8
    m_total = _round_up(rows, tm)
    total = m_total * lanes

    pw_flat = jnp.asarray(pw, jnp.float32).reshape(N, 3)
    if total != N:
        # Padded points are sliced off below; pad with 1.0 so dead lanes stay
        # finite for typical camera poses (value never reaches the output).
        pw_flat = jnp.pad(pw_flat, ((0, total - N), (0, 0)),
                          constant_values=1.0)
    # TODO(synk): if the producer can hand us points already in (3, M, 128)
    # SoA layout, this transpose pass (and the one on the output) disappears.
    pw_planes = pw_flat.T.reshape(3, m_total, lanes)

    cost = pl.CostEstimate(flops=11 * total,
                           transcendentals=total,
                           bytes_accessed=24 * total)

    out = pl.pallas_call(
        cam_project_kernel,
        out_shape=jax.ShapeDtypeStruct((3, m_total, lanes), jnp.float32),
        grid=(m_total // tm,),
        in_specs=[
            pl.BlockSpec(memory_space=pltpu.SMEM),               # A (9,)
            pl.BlockSpec(memory_space=pltpu.SMEM),               # b (3,)
            pl.BlockSpec((3, tm, lanes), lambda i: (0, i, 0)),   # pw planes
        ],
        out_specs=pl.BlockSpec((3, tm, lanes), lambda i: (0, i, 0)),
        compiler_params=pltpu.CompilerParams(
            dimension_semantics=("parallel",)),
        cost_estimate=cost,
    )(a_flat, b_flat, pw_planes)

    return out.reshape(3, total)[:, :N].T  # (N, 3)


if __name__ == "__main__":
    # Deterministic "module parameters" (what CamModel.__init__ would hold).
    theta = 0.1
    r = np.array([[np.cos(theta), -np.sin(theta), 0.0],
                  [np.sin(theta),  np.cos(theta), 0.0],
                  [0.0,            0.0,           1.0]], dtype=np.float32)
    t = np.array([0.1, -0.2, 0.3], dtype=np.float32)
    k = np.array([[500.0,   0.0, 320.0],
                  [  0.0, 510.0, 240.0],
                  [  0.0,   0.0,   1.0]], dtype=np.float32)

    # Example input: N world points, shape (N, 1, 3) as in the PyTorch module.
    key = jax.random.PRNGKey(0)
    N = 200  # deliberately not a multiple of 128 to exercise padding
    pw = jax.random.normal(key, (N, 1, 3), jnp.float32)
    pw = pw + jnp.array([0.0, 0.0, 5.0], jnp.float32)  # keep z away from 0

    out = jax.block_until_ready(cam_model_forward(pw, k, r, t))

    # Pure-JAX reference of the (unfolded) PyTorch forward.
    pw_flat = pw.reshape(N, 3)
    cam = (jnp.asarray(r) @ (pw_flat + jnp.asarray(t)).T).T
    ref = jnp.stack([cam[:, 0] * k[0, 0] + cam[:, 2] * k[0, 2],
                     cam[:, 1] * k[1, 1] + cam[:, 2] * k[1, 2],
                     cam[:, 2]], axis=1)
    ref = ref / ref[:, 2:3]

    assert out.shape == (N, 3)
    # atol covers the benign reassociation from folding K'/R/t into one
    # transform (a few f32 ulps at pixel magnitude ~500).
    assert jnp.allclose(out, ref, rtol=1e-5, atol=1e-3), "kernel/reference mismatch"
    print("KERNEL_OK")
</pallas_src>

<mosaic_0001>
module attributes {stable_mosaic.version = 11 : i64} {
  func.func @cam_project_kernel(%arg0: i32, %arg1: memref<9xf32, #tpu.memory_space<smem>>, %arg2: memref<3xf32, #tpu.memory_space<smem>>, %arg3: memref<3x8x128xf32, #tpu.memory_space<vmem>>, %arg4: memref<3x8x128xf32, #tpu.memory_space<vmem>>) attributes {dimension_semantics = [#tpu.dimension_semantics<parallel>], iteration_bounds = array<i64: 1>, scalar_prefetch = 0 : i64, scratch_operands = 0 : i64, tpu.core_type = #tpu.core_type<tc>, window_params = [{transform_indices = @transform_0, window_bounds = array<i64: 9>}, {transform_indices = @transform_1, window_bounds = array<i64: 3>}, {transform_indices = @transform_2, window_bounds = array<i64: 3, 8, 128>}, {transform_indices = @transform_3, window_bounds = array<i64: 3, 8, 128>}]} {
    %c0 = arith.constant 0 : index
    %c0_0 = arith.constant 0 : index
    %c0_1 = arith.constant 0 : index
    %0 = vector.load %arg3[%c0, %c0_0, %c0_1] : memref<3x8x128xf32, #tpu.memory_space<vmem>>, vector<1x8x128xf32>
    %1 = vector.shape_cast %0 : vector<1x8x128xf32> to vector<8x128xf32>
    %c1 = arith.constant 1 : index
    %c0_2 = arith.constant 0 : index
    %c0_3 = arith.constant 0 : index
    %2 = vector.load %arg3[%c1, %c0_2, %c0_3] : memref<3x8x128xf32, #tpu.memory_space<vmem>>, vector<1x8x128xf32>
    %3 = vector.shape_cast %2 : vector<1x8x128xf32> to vector<8x128xf32>
    %c2 = arith.constant 2 : index
    %c0_4 = arith.constant 0 : index
    %c0_5 = arith.constant 0 : index
    %4 = vector.load %arg3[%c2, %c0_4, %c0_5] : memref<3x8x128xf32, #tpu.memory_space<vmem>>, vector<1x8x128xf32>
    %5 = vector.shape_cast %4 : vector<1x8x128xf32> to vector<8x128xf32>
    %c0_6 = arith.constant 0 : index
    %6 = memref.load %arg1[%c0_6] : memref<9xf32, #tpu.memory_space<smem>>
    %7 = vector.broadcast %6 : f32 to vector<8x128xf32>
    %8 = arith.mulf %7, %1 : vector<8x128xf32>
    %c1_7 = arith.constant 1 : index
    %9 = memref.load %arg1[%c1_7] : memref<9xf32, #tpu.memory_space<smem>>
    %10 = vector.broadcast %9 : f32 to vector<8x128xf32>
    %11 = arith.mulf %10, %3 : vector<8x128xf32>
    %12 = arith.addf %8, %11 : vector<8x128xf32>
    %c2_8 = arith.constant 2 : index
    %13 = memref.load %arg1[%c2_8] : memref<9xf32, #tpu.memory_space<smem>>
    %14 = vector.broadcast %13 : f32 to vector<8x128xf32>
    %15 = arith.mulf %14, %5 : vector<8x128xf32>
    %16 = arith.addf %12, %15 : vector<8x128xf32>
    %c0_9 = arith.constant 0 : index
    %17 = memref.load %arg2[%c0_9] : memref<3xf32, #tpu.memory_space<smem>>
    %18 = vector.broadcast %17 : f32 to vector<8x128xf32>
    %19 = arith.addf %16, %18 : vector<8x128xf32>
    %c3 = arith.constant 3 : index
    %20 = memref.load %arg1[%c3] : memref<9xf32, #tpu.memory_space<smem>>
    %21 = vector.broadcast %20 : f32 to vector<8x128xf32>
    %22 = arith.mulf %21, %1 : vector<8x128xf32>
    %c4 = arith.constant 4 : index
    %23 = memref.load %arg1[%c4] : memref<9xf32, #tpu.memory_space<smem>>
    %24 = vector.broadcast %23 : f32 to vector<8x128xf32>
    %25 = arith.mulf %24, %3 : vector<8x128xf32>
    %26 = arith.addf %22, %25 : vector<8x128xf32>
    %c5 = arith.constant 5 : index
    %27 = memref.load %arg1[%c5] : memref<9xf32, #tpu.memory_space<smem>>
    %28 = vector.broadcast %27 : f32 to vector<8x128xf32>
    %29 = arith.mulf %28, %5 : vector<8x128xf32>
    %30 = arith.addf %26, %29 : vector<8x128xf32>
    %c1_10 = arith.constant 1 : index
    %31 = memref.load %arg2[%c1_10] : memref<3xf32, #tpu.memory_space<smem>>
    %32 = vector.broadcast %31 : f32 to vector<8x128xf32>
    %33 = arith.addf %30, %32 : vector<8x128xf32>
    %c6 = arith.constant 6 : index
    %34 = memref.load %arg1[%c6] : memref<9xf32, #tpu.memory_space<smem>>
    %35 = vector.broadcast %34 : f32 to vector<8x128xf32>
    %36 = arith.mulf %35, %1 : vector<8x128xf32>
    %c7 = arith.constant 7 : index
    %37 = memref.load %arg1[%c7] : memref<9xf32, #tpu.memory_space<smem>>
    %38 = vector.broadcast %37 : f32 to vector<8x128xf32>
    %39 = arith.mulf %38, %3 : vector<8x128xf32>
    %40 = arith.addf %36, %39 : vector<8x128xf32>
    %c8 = arith.constant 8 : index
    %41 = memref.load %arg1[%c8] : memref<9xf32, #tpu.memory_space<smem>>
    %42 = vector.broadcast %41 : f32 to vector<8x128xf32>
    %43 = arith.mulf %42, %5 : vector<8x128xf32>
    %44 = arith.addf %40, %43 : vector<8x128xf32>
    %c2_11 = arith.constant 2 : index
    %45 = memref.load %arg2[%c2_11] : memref<3xf32, #tpu.memory_space<smem>>
    %46 = vector.broadcast %45 : f32 to vector<8x128xf32>
    %47 = arith.addf %44, %46 : vector<8x128xf32>
    %cst = arith.constant 1.000000e+00 : f32
    %48 = vector.broadcast %cst : f32 to vector<8x128xf32>
    %49 = arith.divf %48, %47 : vector<8x128xf32>
    %50 = arith.mulf %19, %49 : vector<8x128xf32>
    %c0_12 = arith.constant 0 : index
    %c0_13 = arith.constant 0 : index
    %c0_14 = arith.constant 0 : index
    %51 = vector.load %arg4[%c0_12, %c0_13, %c0_14] : memref<3x8x128xf32, #tpu.memory_space<vmem>>, vector<1x8x128xf32>
    %52 = vector.shape_cast %51 : vector<1x8x128xf32> to vector<8x128xf32>
    %53 = vector.shape_cast %50 : vector<8x128xf32> to vector<1x8x128xf32>
    tpu.vector_store %arg4[%c0_12, %c0_13, %c0_14], %53 {strides = array<i32>} : memref<3x8x128xf32, #tpu.memory_space<vmem>>, vector<1x8x128xf32>,
    %54 = arith.mulf %33, %49 : vector<8x128xf32>
    %c1_15 = arith.constant 1 : index
    %c0_16 = arith.constant 0 : index
    %c0_17 = arith.constant 0 : index
    %55 = vector.load %arg4[%c1_15, %c0_16, %c0_17] : memref<3x8x128xf32, #tpu.memory_space<vmem>>, vector<1x8x128xf32>
    %56 = vector.shape_cast %55 : vector<1x8x128xf32> to vector<8x128xf32>
    %57 = vector.shape_cast %54 : vector<8x128xf32> to vector<1x8x128xf32>
    tpu.vector_store %arg4[%c1_15, %c0_16, %c0_17], %57 {strides = array<i32>} : memref<3x8x128xf32, #tpu.memory_space<vmem>>, vector<1x8x128xf32>,
    %cst_18 = arith.constant 1.000000e+00 : f32
    %58 = vector.broadcast %cst_18 : f32 to vector<8x128xf32>
    %c2_19 = arith.constant 2 : index
    %c0_20 = arith.constant 0 : index
    %c0_21 = arith.constant 0 : index
    %59 = vector.load %arg4[%c2_19, %c0_20, %c0_21] : memref<3x8x128xf32, #tpu.memory_space<vmem>>, vector<1x8x128xf32>
    %60 = vector.shape_cast %59 : vector<1x8x128xf32> to vector<8x128xf32>
    %61 = vector.shape_cast %58 : vector<8x128xf32> to vector<1x8x128xf32>
    tpu.vector_store %arg4[%c2_19, %c0_20, %c0_21], %61 {strides = array<i32>} : memref<3x8x128xf32, #tpu.memory_space<vmem>>, vector<1x8x128xf32>,
    return
  }
  func.func @transform_0(%arg0: i32) -> i32 {
    %c0_i32 = arith.constant 0 : i32
    %c0_i32_0 = arith.constant 0 : i32
    return %c0_i32 : i32
  }
  func.func @transform_1(%arg0: i32) -> i32 {
    %c0_i32 = arith.constant 0 : i32
    %c0_i32_0 = arith.constant 0 : i32
    return %c0_i32 : i32
  }
  func.func @transform_2(%arg0: i32) -> (i32, i32, i32) {
    %c0_i32 = arith.constant 0 : i32
    %c0_i32_0 = arith.constant 0 : i32
    %c0_i32_1 = arith.constant 0 : i32
    return %c0_i32, %arg0, %c0_i32_0 : i32, i32, i32
  }
  func.func @transform_3(%arg0: i32) -> (i32, i32, i32) {
    %c0_i32 = arith.constant 0 : i32
    %c0_i32_0 = arith.constant 0 : i32
    %c0_i32_1 = arith.constant 0 : i32
    return %c0_i32, %arg0, %c0_i32_0 : i32, i32, i32
  }
}

</mosaic_0001>

<llo_original>
// kernel: tpu_custom_call.1
$region0: #{tpu_custom_call.1}
  #allocation0 [shape = 'u32[]', space=smem, size = 0x4, offset = 0x4, fixed_abs, tag = 'smem constant byte address 0x4 - core index']
  #allocation1 [shape = 'u32[144,128]{1,0:T(1,128)}', space=vmem, size = 0x12000, scoped, tag = 'internal scratch']
  %s0 = inlined_call_operand.hbm [shape: f32[9], index: 0, kind: input, shape index: {}]
  %s1 = inlined_call_operand.vmem [shape: f32[3], index: 1, kind: input, shape index: {}]
  %s2 = inlined_call_operand.hbm [shape: f32[3,8,128], index: 2, kind: input, shape index: {}]
  %s3 = inlined_call_operand.hbm [shape: f32[3,8,128], index: 3, kind: output, shape index: {}]
  %s4 = sld [smem:[#allocation0]]
  $region34: #{tpu_custom_call.1} parent=0
    _
  %s6 = ssub.s32 1, %s4
  %s7 = scalar_select 0, %s6, %s4
  $region1: #{tpu_custom_call.1} parent=0
    #allocation2 [shape = 'u8[512]{0}', space=smem, size = 0x200, scoped, tag = 'input window, operand 0, single buffered']
    #allocation3 [shape = 's32[1]{0}', space=sflag, size = 0x4, scoped, tag = 'scoped memory for tpu_custom_call.1']
    #allocation4 [shape = 's32[1]{0}', space=sflag, size = 0x4, scoped, tag = 'scoped memory for tpu_custom_call.1']
    #allocation5 [shape = 's32[1]{0}', space=sflag, size = 0x4, scoped, tag = 'scoped memory for tpu_custom_call.1']
    #allocation6 [shape = 's32[1]{0}', space=sflag, size = 0x4, scoped, tag = 'scoped memory for tpu_custom_call.1']
    #allocation7 [shape = 'u8[512]{0}', space=smem, size = 0x200, scoped, tag = 'input window, operand 1, single buffered']
    #allocation8 [shape = 'u8[12288]{0}', space=vmem, size = 0x3000, scoped, tag = 'input window, operand 2, single buffered']
    #allocation9 [shape = 'u8[12288]{0}', space=vmem, size = 0x3000, scoped, tag = 'output window, operand 0, single buffered']
    %8 = vsyncpa [#allocation5], 0
    %9 = vsyncpa [#allocation6], 0
    %10 = vsyncpa [#allocation3], 0
    %11 = vsyncpa [#allocation4], 0
    // Predicated region
    $region2: #{tpu_custom_call.1} parent=1 // pred_check
      _
    $region3: #{tpu_custom_call.1} parent=1 // pred_check_branch
      %13 = sbr.rel (0) target = $region5
    $region4: #{tpu_custom_call.1} parent=1 // pred_region
      %s15 = ssub.s32 16, 16
      %16 = vsyncadd [#allocation5], %s15
      %19 = dma.hbm_to_smem %s0, 16, [#allocation2], [#allocation5]
    $region5: #{tpu_custom_call.1} parent=1 // pred_fallthru
      _
    // Predicated region
    $region6: #{tpu_custom_call.1} parent=1 // pred_check
      _
    $region7: #{tpu_custom_call.1} parent=1 // pred_check_branch
      %21 = sbr.rel (0) target = $region9
    $region8: #{tpu_custom_call.1} parent=1 // pred_region
      %s23 = ssub.s32 16, 16
      %24 = vsyncadd [#allocation6], %s23
      %s26 = sshll.u32 %s1, 4
      %s27 = int_to_ptr.vmem [resolvable:$true] %s26
      %29 = dma.vmem_to_smem %s27, 16, [#allocation7], [#allocation6]
    $region9: #{tpu_custom_call.1} parent=1 // pred_fallthru
      _
    // Predicated region
    $region10: #{tpu_custom_call.1} parent=1 // pred_check
      _
    $region11: #{tpu_custom_call.1} parent=1 // pred_check_branch
      %31 = sbr.rel (0) target = $region13
    $region12: #{tpu_custom_call.1} parent=1 // pred_region
      %s33 = ssub.s32 384, 384
      %34 = vsyncadd [#allocation3], %s33
      %s35 = sshll.u32 [#allocation8], 4
      %s36 = int_to_ptr.vmem [resolvable:$true] %s35
      %41 = dma.hbm_to_vmem [thread:$0]  %s2, 384, %s36, [#allocation3], 128, 128, 8
    $region13: #{tpu_custom_call.1} parent=1 // pred_fallthru
      _
    // Predicated region
    $region14: #{tpu_custom_call.1} parent=1 // pred_check
      _
    $region15: #{tpu_custom_call.1} parent=1 // pred_check_branch
      %43 = sbr.rel (0) target = $region17
    $region16: #{tpu_custom_call.1} parent=1 // pred_region
      %44 = dma.done [#allocation5], 16
    $region17: #{tpu_custom_call.1} parent=1 // pred_fallthru
      _
    // Predicated region
    $region18: #{tpu_custom_call.1} parent=1 // pred_check
      _
    $region19: #{tpu_custom_call.1} parent=1 // pred_check_branch
      %46 = sbr.rel (0) target = $region21
    $region20: #{tpu_custom_call.1} parent=1 // pred_region
      %47 = dma.done [#allocation6], 16
    $region21: #{tpu_custom_call.1} parent=1 // pred_fallthru
      _
    // Predicated region
    $region22: #{tpu_custom_call.1} parent=1 // pred_check
      _
    $region23: #{tpu_custom_call.1} parent=1 // pred_check_branch
      %49 = sbr.rel (0) target = $region25
    $region24: #{tpu_custom_call.1} parent=1 // pred_region
      %50 = dma.done [#allocation3], 384
    $region25: #{tpu_custom_call.1} parent=1 // pred_fallthru
      _
    %51 = sfence
    %v52 = vld [vmem:[#allocation8] sm:$0xff]
    %s53 = scalar_lea.vmem [#allocation8], 8
    %v54 = vld [vmem:[%s53] sm:$0xff]
    %s55 = scalar_lea.vmem [#allocation8], 16
    %v56 = vld [vmem:[%s55] sm:$0xff]
    %s57 = sld [smem:[#allocation2]]
    %v58 = vstv %s57
    %v59 = vmul.f32 %v58, %v52
    %s60 = sld [smem:[#allocation2 + $0x1]]
    %v61 = vstv %s60
    %v62 = vmul.f32 %v61, %v54
    %v63 = vadd.f32 %v59, %v62
    %s64 = sld [smem:[#allocation2 + $0x2]]
    %v65 = vstv %s64
    %v66 = vmul.f32 %v65, %v56
    %v67 = vadd.f32 %v63, %v66
    %s68 = sld [smem:[#allocation7]]
    %v69 = vstv %s68
    %v70 = vadd.f32 %v67, %v69
    %s71 = sld [smem:[#allocation2 + $0x3]]
    %v72 = vstv %s71
    %v73 = vmul.f32 %v72, %v52
    %s74 = sld [smem:[#allocation2 + $0x4]]
    %v75 = vstv %s74
    %v76 = vmul.f32 %v75, %v54
    %v77 = vadd.f32 %v73, %v76
    %s78 = sld [smem:[#allocation2 + $0x5]]
    %v79 = vstv %s78
    %v80 = vmul.f32 %v79, %v56
    %v81 = vadd.f32 %v77, %v80
    %s82 = sld [smem:[#allocation7 + $0x1]]
    %v83 = vstv %s82
    %v84 = vadd.f32 %v81, %v83
    %s85 = sld [smem:[#allocation2 + $0x6]]
    %v86 = vstv %s85
    %v87 = vmul.f32 %v86, %v52
    %s88 = sld [smem:[#allocation2 + $0x7]]
    %v89 = vstv %s88
    %v90 = vmul.f32 %v89, %v54
    %v91 = vadd.f32 %v87, %v90
    %s92 = sld [smem:[#allocation2 + $0x8]]
    %v93 = vstv %s92
    %v94 = vmul.f32 %v93, %v56
    %v95 = vadd.f32 %v91, %v94
    %s96 = sld [smem:[#allocation7 + $0x2]]
    %v97 = vstv %s96
    %v98 = vadd.f32 %v95, %v97
    %v99 = vrcp.pop %v98
    %v100 = vmul.f32 1.0, %v99
    %v101 = vmul.f32 %v70, %v100
    %102 = vst [vmem:[#allocation9] sm:$0xff] %v101
    %v103 = vmul.f32 %v84, %v100
    %s104 = scalar_lea.vmem [#allocation9], 8
    %105 = vst [vmem:[%s104] sm:$0xff] %v103
    %s106 = scalar_lea.vmem [#allocation9], 16
    %107 = vst [vmem:[%s106] sm:$0xff] 1.0
    // Predicated region
    $region26: #{tpu_custom_call.1} parent=1 // pred_check
      _
    $region27: #{tpu_custom_call.1} parent=1 // pred_check_branch
      %109 = sbr.rel (0) target = $region29
    $region28: #{tpu_custom_call.1} parent=1 // pred_region
      %s111 = ssub.s32 384, 384
      %112 = vsyncadd [#allocation4], %s111
      %s113 = sshll.u32 [#allocation9], 4
      %s114 = int_to_ptr.vmem [resolvable:$true] %s113
      %119 = dma.vmem_to_hbm [thread:$0]  %s114, 384, %s3, [#allocation4], 128, 128, 8
    $region29: #{tpu_custom_call.1} parent=1 // pred_fallthru
      _
    // Predicated region
    $region30: #{tpu_custom_call.1} parent=1 // pred_check
      _
    $region31: #{tpu_custom_call.1} parent=1 // pred_check_branch
      %121 = sbr.rel (0) target = $region33
    $region32: #{tpu_custom_call.1} parent=1 // pred_region
      %122 = dma.done [#allocation4], 384
    $region33: #{tpu_custom_call.1} parent=1 // pred_fallthru
      _
    %123 = vsyncpa [#allocation3], 1
    %124 = vsyncpa [#allocation4], 1
    %125 = vsyncpa [#allocation5], 1
    %126 = vsyncpa [#allocation6], 1

</llo_original>
